<compile_context>
chip_gen: v7x
topology: tpu7x:2x2x1
jax: 0.10.0
libtpu: 0.0.40
codegen_flags: <defaults>
</compile_context>

<pallas_src>
import functools

import jax
import jax.numpy as jnp
from jax.experimental import pallas as pl
from jax.experimental.pallas import tpu as pltpu


def _round_up(x, m):
    return ((x + m - 1) // m) * m


def _autoencoder_kernel(
    x_ref,                               # [D, TN] f32
    we1_ref, be1_ref, we2_ref, be2_ref,  # encoder params ([H,D],[H,1],[D,H],[D,1])
    wd1_ref, bd1_ref, wd2_ref, bd2_ref,  # decoder params
    out_ref, dy_ref,                     # [D, TN] each
    *, inv_T,
):
    x = x_ref[...]

    # ---- encoder: Linear -> ReLU -> Linear ----
    h = jnp.dot(we1_ref[...], x, preferred_element_type=jnp.float32) + be1_ref[...]
    h = jnp.maximum(h, 0.0)
    z = jnp.dot(we2_ref[...], h, preferred_element_type=jnp.float32) + be2_ref[...]

    # ---- softmax over the feature axis, fused with sharpen ----
    # sharpen(softmax(z), T) == softmax(z / T)   (2-D branch of the reference)
    if inv_T != 1.0:                      # static Python constant; skipped for T == 1
        z = z * inv_T
    z = z - jnp.max(z, axis=0, keepdims=True)
    ez = jnp.exp(z)
    d_y = ez * pl.reciprocal(jnp.sum(ez, axis=0, keepdims=True), approx=True)

    # ---- decoder: Linear -> ReLU -> Linear -> Softmax ----
    h2 = jnp.dot(wd1_ref[...], d_y, preferred_element_type=jnp.float32) + bd1_ref[...]
    h2 = jnp.maximum(h2, 0.0)
    z2 = jnp.dot(wd2_ref[...], h2, preferred_element_type=jnp.float32) + bd2_ref[...]
    z2 = z2 - jnp.max(z2, axis=0, keepdims=True)
    ez2 = jnp.exp(z2)
    dec = ez2 * pl.reciprocal(jnp.sum(ez2, axis=0, keepdims=True), approx=True)

    out_ref[...] = dec.astype(out_ref.dtype)
    dy_ref[...] = d_y.astype(dy_ref.dtype)


def init_autoencoder_params(key, input_dim=2, encode_dim=3):
    """nn.Linear weights ~ N(0, 0.01), biases = 0 (matches initialize_weights).

    Weights are kept in the PyTorch-native [out_features, in_features] layout.
    """
    h = encode_dim ** 2
    keys = jax.random.split(key, 4)

    def lin(k, fan_in, fan_out):
        w = 0.01 * jax.random.normal(k, (fan_out, fan_in), dtype=jnp.float32)
        b = jnp.zeros((fan_out,), dtype=jnp.float32)
        return w, b

    we1, be1 = lin(keys[0], input_dim, h)
    we2, be2 = lin(keys[1], h, input_dim)
    wd1, bd1 = lin(keys[2], input_dim, h)
    wd2, bd2 = lin(keys[3], h, input_dim)
    return dict(we1=we1, be1=be1, we2=we2, be2=be2,
                wd1=wd1, bd1=bd1, wd2=wd2, bd2=bd2)


def autoencoder_forward(x, params, input_dim=2, T=1.0, block_n=16384):
    """Runs the AutoEncoder forward. Returns (decoder(d_y), d_y), each [N, input_dim]."""
    x2d = x.reshape(-1, input_dim).astype(jnp.float32)      # x.view(-1, d)
    n, d = x2d.shape
    hdim = params["we1"].shape[0]

    # Transposed [D, N] layout: batch rides the 128-lane axis -> lane-dense IO.
    block_n = max(128, _round_up(block_n, 128))
    tn = min(block_n, _round_up(n, 512))                    # lane-dim tile (multiple of 128)
    n_pad = _round_up(n, tn)
    xT = x2d.T
    if n_pad != n:
        xT = jnp.pad(xT, ((0, 0), (0, n_pad - n)))          # zero cols flow through harmlessly

    be1 = params["be1"].reshape(hdim, 1)
    be2 = params["be2"].reshape(d, 1)
    bd1 = params["bd1"].reshape(hdim, 1)
    bd2 = params["bd2"].reshape(d, 1)

    act_spec = pl.BlockSpec((d, tn), lambda i: (0, i))      # x / outputs: tile the batch

    def const_spec(shape):                                  # weights/biases: VMEM-resident
        return pl.BlockSpec(shape, lambda i: tuple(0 for _ in shape))

    param_bytes = 4 * sum(int(p.size) for p in (params["we1"], be1, params["we2"], be2,
                                                params["wd1"], bd1, params["wd2"], bd2))
    cost = pl.CostEstimate(
        flops=int((4 * 2 * d * hdim + 8 * d) * n_pad),      # 4 matmuls + softmax misc
        transcendentals=int((2 * d + 2) * n_pad),           # exps + approx reciprocals
        bytes_accessed=int(3 * d * 4 * n_pad + param_bytes),
    )

    kernel = functools.partial(_autoencoder_kernel, inv_T=1.0 / T)
    decT, dyT = pl.pallas_call(
        kernel,
        out_shape=(jax.ShapeDtypeStruct((d, n_pad), jnp.float32),   # decoder(d_y)
                   jax.ShapeDtypeStruct((d, n_pad), jnp.float32)),  # d_y
        grid=(n_pad // tn,),
        in_specs=[
            act_spec,
            const_spec((hdim, d)), const_spec((hdim, 1)),
            const_spec((d, hdim)), const_spec((d, 1)),
            const_spec((hdim, d)), const_spec((hdim, 1)),
            const_spec((d, hdim)), const_spec((d, 1)),
        ],
        out_specs=(act_spec, act_spec),
        compiler_params=pltpu.CompilerParams(dimension_semantics=("parallel",)),
        cost_estimate=cost,
    )(xT, params["we1"], be1, params["we2"], be2,
      params["wd1"], bd1, params["wd2"], bd2)

    # Back to the PyTorch-facing [N, D] layout (layout plumbing only).
    return decT[:, :n].T, dyT[:, :n].T


def _reference_forward(x, params, input_dim=2, T=1.0):
    """Pure-JAX reference (exact divides, un-fused sharpen) for correctness checking."""
    x2d = x.reshape(-1, input_dim).astype(jnp.float32)
    h = jnp.maximum(x2d @ params["we1"].T + params["be1"], 0.0)
    z = h @ params["we2"].T + params["be2"]
    d_y = jax.nn.softmax(z, axis=1)
    tempered = jnp.power(d_y, 1.0 / T)
    d_y = tempered / jnp.sum(tempered, axis=-1, keepdims=True)
    h2 = jnp.maximum(d_y @ params["wd1"].T + params["bd1"], 0.0)
    z2 = h2 @ params["wd2"].T + params["bd2"]
    dec = jax.nn.softmax(z2, axis=1)
    return dec, d_y


if __name__ == "__main__":
    INPUT_DIM = 2
    ENCODE_DIM = 3
    BATCH = 8

    key = jax.random.PRNGKey(0)
    k_params, k_x, k_big = jax.random.split(key, 3)

    params = init_autoencoder_params(k_params, INPUT_DIM, ENCODE_DIM)

    # x can be any shape that flattens to (-1, input_dim); use [4, 2, 2] -> [8, 2]
    x = jax.random.normal(k_x, (4, 2, INPUT_DIM), dtype=jnp.float32)
    dec_out, d_y = autoencoder_forward(x, params, input_dim=INPUT_DIM, T=1.0)
    dec_out, d_y = jax.block_until_ready((dec_out, d_y))

    ref_dec, ref_dy = _reference_forward(x, params, input_dim=INPUT_DIM, T=1.0)
    assert dec_out.shape == (BATCH, INPUT_DIM) and d_y.shape == (BATCH, INPUT_DIM)
    # approx=True reciprocal -> allow ~1e-3 on probability outputs
    assert jnp.allclose(dec_out, ref_dec, atol=2e-3, rtol=2e-3)
    assert jnp.allclose(d_y, ref_dy, atol=2e-3, rtol=2e-3)

    # Exercise the multi-block grid path (grid=(4,) with a 256-wide batch tile).
    x_big = jax.random.normal(k_big, (1024, INPUT_DIM), dtype=jnp.float32)
    dec_b, dy_b = autoencoder_forward(x_big, params, input_dim=INPUT_DIM, T=1.0,
                                      block_n=256)
    dec_b, dy_b = jax.block_until_ready((dec_b, dy_b))
    ref_dec_b, ref_dy_b = _reference_forward(x_big, params, input_dim=INPUT_DIM, T=1.0)
    assert dec_b.shape == (1024, INPUT_DIM) and dy_b.shape == (1024, INPUT_DIM)
    assert jnp.allclose(dec_b, ref_dec_b, atol=2e-3, rtol=2e-3)
    assert jnp.allclose(dy_b, ref_dy_b, atol=2e-3, rtol=2e-3)

    print("KERNEL_OK")
</pallas_src>

<mosaic_0001>
module attributes {stable_mosaic.version = 11 : i64} {
  func.func @_autoencoder_kernel(%arg0: i32, %arg1: memref<2x512xf32, #tpu.memory_space<vmem>>, %arg2: memref<9x2xf32, #tpu.memory_space<vmem>>, %arg3: memref<9x1xf32, #tpu.memory_space<vmem>>, %arg4: memref<2x9xf32, #tpu.memory_space<vmem>>, %arg5: memref<2x1xf32, #tpu.memory_space<vmem>>, %arg6: memref<9x2xf32, #tpu.memory_space<vmem>>, %arg7: memref<9x1xf32, #tpu.memory_space<vmem>>, %arg8: memref<2x9xf32, #tpu.memory_space<vmem>>, %arg9: memref<2x1xf32, #tpu.memory_space<vmem>>, %arg10: memref<2x512xf32, #tpu.memory_space<vmem>>, %arg11: memref<2x512xf32, #tpu.memory_space<vmem>>) attributes {dimension_semantics = [#tpu.dimension_semantics<parallel>], iteration_bounds = array<i64: 1>, scalar_prefetch = 0 : i64, scratch_operands = 0 : i64, tpu.core_type = #tpu.core_type<tc>, window_params = [{transform_indices = @transform_0, window_bounds = array<i64: 2, 512>}, {pipeline_mode = #tpu.pipeline_mode<synchronous>, transform_indices = @transform_1, window_bounds = array<i64: 9, 2>}, {pipeline_mode = #tpu.pipeline_mode<synchronous>, transform_indices = @transform_2, window_bounds = array<i64: 9, 1>}, {pipeline_mode = #tpu.pipeline_mode<synchronous>, transform_indices = @transform_3, window_bounds = array<i64: 2, 9>}, {pipeline_mode = #tpu.pipeline_mode<synchronous>, transform_indices = @transform_4, window_bounds = array<i64: 2, 1>}, {pipeline_mode = #tpu.pipeline_mode<synchronous>, transform_indices = @transform_5, window_bounds = array<i64: 9, 2>}, {pipeline_mode = #tpu.pipeline_mode<synchronous>, transform_indices = @transform_6, window_bounds = array<i64: 9, 1>}, {pipeline_mode = #tpu.pipeline_mode<synchronous>, transform_indices = @transform_7, window_bounds = array<i64: 2, 9>}, {pipeline_mode = #tpu.pipeline_mode<synchronous>, transform_indices = @transform_8, window_bounds = array<i64: 2, 1>}, {transform_indices = @transform_9, window_bounds = array<i64: 2, 512>}, {transform_indices = @transform_10, window_bounds = array<i64: 2, 512>}]} {
    %c0 = arith.constant 0 : index
    %c0_0 = arith.constant 0 : index
    %0 = vector.load %arg1[%c0, %c0_0] : memref<2x512xf32, #tpu.memory_space<vmem>>, vector<2x512xf32>
    %c0_1 = arith.constant 0 : index
    %c0_2 = arith.constant 0 : index
    %1 = vector.load %arg2[%c0_1, %c0_2] : memref<9x2xf32, #tpu.memory_space<vmem>>, vector<9x2xf32>
    %cst = arith.constant dense<0.000000e+00> : vector<9x512xf32>
    %2 = tpu.matmul %1, %0, %cst {dimension_numbers = #tpu.dot_dimension_numbers<[1], [0], [0], [1], [0, 0, 1, 1], [], []>} : vector<9x2xf32>, vector<2x512xf32>, vector<9x512xf32> -> vector<9x512xf32>
    %c0_3 = arith.constant 0 : index
    %c0_4 = arith.constant 0 : index
    %3 = vector.load %arg3[%c0_3, %c0_4] : memref<9x1xf32, #tpu.memory_space<vmem>>, vector<9x1xf32>
    %4 = vector.broadcast %3 : vector<9x1xf32> to vector<9x512xf32>
    %5 = arith.addf %2, %4 : vector<9x512xf32>
    %cst_5 = arith.constant 0.000000e+00 : f32
    %6 = vector.broadcast %cst_5 : f32 to vector<9x512xf32>
    %7 = arith.maximumf %5, %6 : vector<9x512xf32>
    %c0_6 = arith.constant 0 : index
    %c0_7 = arith.constant 0 : index
    %8 = vector.load %arg4[%c0_6, %c0_7] : memref<2x9xf32, #tpu.memory_space<vmem>>, vector<2x9xf32>
    %cst_8 = arith.constant dense<0.000000e+00> : vector<2x512xf32>
    %9 = tpu.matmul %8, %7, %cst_8 {dimension_numbers = #tpu.dot_dimension_numbers<[1], [0], [0], [1], [0, 0, 1, 1], [], []>} : vector<2x9xf32>, vector<9x512xf32>, vector<2x512xf32> -> vector<2x512xf32>
    %c0_9 = arith.constant 0 : index
    %c0_10 = arith.constant 0 : index
    %10 = vector.load %arg5[%c0_9, %c0_10] : memref<2x1xf32, #tpu.memory_space<vmem>>, vector<2x1xf32>
    %11 = vector.broadcast %10 : vector<2x1xf32> to vector<2x512xf32>
    %12 = arith.addf %9, %11 : vector<2x512xf32>
    %cst_11 = arith.constant dense<0xFF800000> : vector<512xf32>
    %13 = vector.multi_reduction <maximumf>, %12, %cst_11 [0] : vector<2x512xf32> to vector<512xf32>
    %14 = vector.shape_cast %13 : vector<512xf32> to vector<1x512xf32>
    %15 = vector.broadcast %14 : vector<1x512xf32> to vector<2x512xf32>
    %16 = arith.subf %12, %15 : vector<2x512xf32>
    %17 = math.exp %16 : vector<2x512xf32>
    %cst_12 = arith.constant dense<0.000000e+00> : vector<512xf32>
    %18 = vector.multi_reduction <add>, %17, %cst_12 [0] : vector<2x512xf32> to vector<512xf32>
    %19 = vector.shape_cast %18 : vector<512xf32> to vector<1x512xf32>
    %20 = tpu.reciprocal %19 {approx = true} : vector<1x512xf32> -> vector<1x512xf32>
    %21 = vector.broadcast %20 : vector<1x512xf32> to vector<2x512xf32>
    %22 = arith.mulf %17, %21 : vector<2x512xf32>
    %c0_13 = arith.constant 0 : index
    %c0_14 = arith.constant 0 : index
    %23 = vector.load %arg6[%c0_13, %c0_14] : memref<9x2xf32, #tpu.memory_space<vmem>>, vector<9x2xf32>
    %cst_15 = arith.constant dense<0.000000e+00> : vector<9x512xf32>
    %24 = tpu.matmul %23, %22, %cst_15 {dimension_numbers = #tpu.dot_dimension_numbers<[1], [0], [0], [1], [0, 0, 1, 1], [], []>} : vector<9x2xf32>, vector<2x512xf32>, vector<9x512xf32> -> vector<9x512xf32>
    %c0_16 = arith.constant 0 : index
    %c0_17 = arith.constant 0 : index
    %25 = vector.load %arg7[%c0_16, %c0_17] : memref<9x1xf32, #tpu.memory_space<vmem>>, vector<9x1xf32>
    %26 = vector.broadcast %25 : vector<9x1xf32> to vector<9x512xf32>
    %27 = arith.addf %24, %26 : vector<9x512xf32>
    %cst_18 = arith.constant 0.000000e+00 : f32
    %28 = vector.broadcast %cst_18 : f32 to vector<9x512xf32>
    %29 = arith.maximumf %27, %28 : vector<9x512xf32>
    %c0_19 = arith.constant 0 : index
    %c0_20 = arith.constant 0 : index
    %30 = vector.load %arg8[%c0_19, %c0_20] : memref<2x9xf32, #tpu.memory_space<vmem>>, vector<2x9xf32>
    %cst_21 = arith.constant dense<0.000000e+00> : vector<2x512xf32>
    %31 = tpu.matmul %30, %29, %cst_21 {dimension_numbers = #tpu.dot_dimension_numbers<[1], [0], [0], [1], [0, 0, 1, 1], [], []>} : vector<2x9xf32>, vector<9x512xf32>, vector<2x512xf32> -> vector<2x512xf32>
    %c0_22 = arith.constant 0 : index
    %c0_23 = arith.constant 0 : index
    %32 = vector.load %arg9[%c0_22, %c0_23] : memref<2x1xf32, #tpu.memory_space<vmem>>, vector<2x1xf32>
    %33 = vector.broadcast %32 : vector<2x1xf32> to vector<2x512xf32>
    %34 = arith.addf %31, %33 : vector<2x512xf32>
    %cst_24 = arith.constant dense<0xFF800000> : vector<512xf32>
    %35 = vector.multi_reduction <maximumf>, %34, %cst_24 [0] : vector<2x512xf32> to vector<512xf32>
    %36 = vector.shape_cast %35 : vector<512xf32> to vector<1x512xf32>
    %37 = vector.broadcast %36 : vector<1x512xf32> to vector<2x512xf32>
    %38 = arith.subf %34, %37 : vector<2x512xf32>
    %39 = math.exp %38 : vector<2x512xf32>
    %cst_25 = arith.constant dense<0.000000e+00> : vector<512xf32>
    %40 = vector.multi_reduction <add>, %39, %cst_25 [0] : vector<2x512xf32> to vector<512xf32>
    %41 = vector.shape_cast %40 : vector<512xf32> to vector<1x512xf32>
    %42 = tpu.reciprocal %41 {approx = true} : vector<1x512xf32> -> vector<1x512xf32>
    %43 = vector.broadcast %42 : vector<1x512xf32> to vector<2x512xf32>
    %44 = arith.mulf %39, %43 : vector<2x512xf32>
    %c0_26 = arith.constant 0 : index
    %c0_27 = arith.constant 0 : index
    %45 = vector.load %arg10[%c0_26, %c0_27] : memref<2x512xf32, #tpu.memory_space<vmem>>, vector<2x512xf32>
    tpu.vector_store %arg10[%c0_26, %c0_27], %44 {strides = array<i32>} : memref<2x512xf32, #tpu.memory_space<vmem>>, vector<2x512xf32>,
    %c0_28 = arith.constant 0 : index
    %c0_29 = arith.constant 0 : index
    %46 = vector.load %arg11[%c0_28, %c0_29] : memref<2x512xf32, #tpu.memory_space<vmem>>, vector<2x512xf32>
    tpu.vector_store %arg11[%c0_28, %c0_29], %22 {strides = array<i32>} : memref<2x512xf32, #tpu.memory_space<vmem>>, vector<2x512xf32>,
    return
  }
  func.func @transform_0(%arg0: i32) -> (i32, i32) {
    %c0_i32 = arith.constant 0 : i32
    %c0_i32_0 = arith.constant 0 : i32
    return %c0_i32, %arg0 : i32, i32
  }
  func.func @transform_1(%arg0: i32) -> (i32, i32) {
    %c0_i32 = arith.constant 0 : i32
    %c0_i32_0 = arith.constant 0 : i32
    %c0_i32_1 = arith.constant 0 : i32
    return %c0_i32, %c0_i32_0 : i32, i32
  }
  func.func @transform_2(%arg0: i32) -> (i32, i32) {
    %c0_i32 = arith.constant 0 : i32
    %c0_i32_0 = arith.constant 0 : i32
    %c0_i32_1 = arith.constant 0 : i32
    return %c0_i32, %c0_i32_0 : i32, i32
  }
  func.func @transform_3(%arg0: i32) -> (i32, i32) {
    %c0_i32 = arith.constant 0 : i32
    %c0_i32_0 = arith.constant 0 : i32
    %c0_i32_1 = arith.constant 0 : i32
    return %c0_i32, %c0_i32_0 : i32, i32
  }
  func.func @transform_4(%arg0: i32) -> (i32, i32) {
    %c0_i32 = arith.constant 0 : i32
    %c0_i32_0 = arith.constant 0 : i32
    %c0_i32_1 = arith.constant 0 : i32
    return %c0_i32, %c0_i32_0 : i32, i32
  }
  func.func @transform_5(%arg0: i32) -> (i32, i32) {
    %c0_i32 = arith.constant 0 : i32
    %c0_i32_0 = arith.constant 0 : i32
    %c0_i32_1 = arith.constant 0 : i32
    return %c0_i32, %c0_i32_0 : i32, i32
  }
  func.func @transform_6(%arg0: i32) -> (i32, i32) {
    %c0_i32 = arith.constant 0 : i32
    %c0_i32_0 = arith.constant 0 : i32
    %c0_i32_1 = arith.constant 0 : i32
    return %c0_i32, %c0_i32_0 : i32, i32
  }
  func.func @transform_7(%arg0: i32) -> (i32, i32) {
    %c0_i32 = arith.constant 0 : i32
    %c0_i32_0 = arith.constant 0 : i32
    %c0_i32_1 = arith.constant 0 : i32
    return %c0_i32, %c0_i32_0 : i32, i32
  }
  func.func @transform_8(%arg0: i32) -> (i32, i32) {
    %c0_i32 = arith.constant 0 : i32
    %c0_i32_0 = arith.constant 0 : i32
    %c0_i32_1 = arith.constant 0 : i32
    return %c0_i32, %c0_i32_0 : i32, i32
  }
  func.func @transform_9(%arg0: i32) -> (i32, i32) {
    %c0_i32 = arith.constant 0 : i32
    %c0_i32_0 = arith.constant 0 : i32
    return %c0_i32, %arg0 : i32, i32
  }
  func.func @transform_10(%arg0: i32) -> (i32, i32) {
    %c0_i32 = arith.constant 0 : i32
    %c0_i32_0 = arith.constant 0 : i32
    return %c0_i32, %arg0 : i32, i32
  }
}

</mosaic_0001>

<llo_original>
// kernel: tpu_custom_call.1
$region0: #{tpu_custom_call.1}
  #allocation0 [shape = 'u32[]', space=smem, size = 0x4, offset = 0x4, fixed_abs, tag = 'smem constant byte address 0x4 - core index']
  #allocation1 [shape = 'u32[144,128]{1,0:T(1,128)}', space=vmem, size = 0x12000, scoped, tag = 'internal scratch']
  %s0 = inlined_call_operand.vmem [shape: f32[2,512], index: 0, kind: input, shape index: {}]
  %s1 = inlined_call_operand.vmem [shape: f32[9,2], index: 1, kind: input, shape index: {}]
  %s2 = inlined_call_operand.vmem [shape: f32[9,1], index: 2, kind: input, shape index: {}]
  %s3 = inlined_call_operand.vmem [shape: f32[2,9], index: 3, kind: input, shape index: {}]
  %s4 = inlined_call_operand.vmem [shape: f32[2,1], index: 4, kind: input, shape index: {}]
  %s5 = inlined_call_operand.vmem [shape: f32[9,2], index: 5, kind: input, shape index: {}]
  %s6 = inlined_call_operand.vmem [shape: f32[9,1], index: 6, kind: input, shape index: {}]
  %s7 = inlined_call_operand.vmem [shape: f32[2,9], index: 7, kind: input, shape index: {}]
  %s8 = inlined_call_operand.vmem [shape: f32[2,1], index: 8, kind: input, shape index: {}]
  %s9 = inlined_call_operand.hbm [shape: f32[2,512], index: 9, kind: output, shape index: {0}]
  %s10 = inlined_call_operand.hbm [shape: f32[2,512], index: 10, kind: output, shape index: {1}]
  %11 = xla_tuple %s9, %s10
  %s12 = sld [smem:[#allocation0]]
  $region54: #{tpu_custom_call.1} parent=0
    _
  %s14 = ssub.s32 1, %s12
  %s15 = scalar_select 0, %s14, %s12
  $region1: #{tpu_custom_call.1} parent=0
    #allocation2 [shape = 'u8[4096]{0}', space=vmem, size = 0x1000, scoped, tag = 'output window, operand 0, single buffered']
    #allocation3 [shape = 's32[1]{0}', space=sflag, size = 0x4, scoped, tag = 'scoped memory for tpu_custom_call.1']
    #allocation4 [shape = 'u8[4096]{0}', space=vmem, size = 0x1000, scoped, tag = 'output window, operand 1, single buffered']
    #allocation5 [shape = 's32[1]{0}', space=sflag, size = 0x4, scoped, tag = 'scoped memory for tpu_custom_call.1']
    %16 = vsyncpa [#allocation3], 0
    %17 = vsyncpa [#allocation5], 0
    // Predicated region
    $region2: #{tpu_custom_call.1} parent=1 // pred_check
      _
    $region3: #{tpu_custom_call.1} parent=1 // pred_check_branch
      %19 = sbr.rel (0) target = $region5
    $region4: #{tpu_custom_call.1} parent=1 // pred_region
      _
    $region5: #{tpu_custom_call.1} parent=1 // pred_fallthru
      _
    // Predicated region
    $region6: #{tpu_custom_call.1} parent=1 // pred_check
      _
    $region7: #{tpu_custom_call.1} parent=1 // pred_check_branch
      %21 = sbr.rel (0) target = $region9
    $region8: #{tpu_custom_call.1} parent=1 // pred_region
      _
    $region9: #{tpu_custom_call.1} parent=1 // pred_fallthru
      _
    // Predicated region
    $region10: #{tpu_custom_call.1} parent=1 // pred_check
      _
    $region11: #{tpu_custom_call.1} parent=1 // pred_check_branch
      %23 = sbr.rel (0) target = $region13
    $region12: #{tpu_custom_call.1} parent=1 // pred_region
      _
    $region13: #{tpu_custom_call.1} parent=1 // pred_fallthru
      _
    // Predicated region
    $region14: #{tpu_custom_call.1} parent=1 // pred_check
      _
    $region15: #{tpu_custom_call.1} parent=1 // pred_check_branch
      %25 = sbr.rel (0) target = $region17
    $region16: #{tpu_custom_call.1} parent=1 // pred_region
      _
    $region17: #{tpu_custom_call.1} parent=1 // pred_fallthru
      _
    // Predicated region
    $region18: #{tpu_custom_call.1} parent=1 // pred_check
      _
    $region19: #{tpu_custom_call.1} parent=1 // pred_check_branch
      %27 = sbr.rel (0) target = $region21
    $region20: #{tpu_custom_call.1} parent=1 // pred_region
      _
    $region21: #{tpu_custom_call.1} parent=1 // pred_fallthru
      _
    // Predicated region
    $region22: #{tpu_custom_call.1} parent=1 // pred_check
      _
    $region23: #{tpu_custom_call.1} parent=1 // pred_check_branch
      %29 = sbr.rel (0) target = $region25
    $region24: #{tpu_custom_call.1} parent=1 // pred_region
      _
    $region25: #{tpu_custom_call.1} parent=1 // pred_fallthru
      _
    // Predicated region
    $region26: #{tpu_custom_call.1} parent=1 // pred_check
      _
    $region27: #{tpu_custom_call.1} parent=1 // pred_check_branch
      %31 = sbr.rel (0) target = $region29
    $region28: #{tpu_custom_call.1} parent=1 // pred_region
      _
    $region29: #{tpu_custom_call.1} parent=1 // pred_fallthru
      _
    // Predicated region
    $region30: #{tpu_custom_call.1} parent=1 // pred_check
      _
    $region31: #{tpu_custom_call.1} parent=1 // pred_check_branch
      %33 = sbr.rel (0) target = $region33
    $region32: #{tpu_custom_call.1} parent=1 // pred_region
      _
    $region33: #{tpu_custom_call.1} parent=1 // pred_fallthru
      _
    // Predicated region
    $region34: #{tpu_custom_call.1} parent=1 // pred_check
      _
    $region35: #{tpu_custom_call.1} parent=1 // pred_check_branch
      %35 = sbr.rel (0) target = $region37
    $region36: #{tpu_custom_call.1} parent=1 // pred_region
      _
    $region37: #{tpu_custom_call.1} parent=1 // pred_fallthru
      _
    %v36 = vld [vmem:[%s0] sm:$0xff]
    %v37 = vld [vmem:[%s1] sm:$0xff]
    %v38 = vld [vmem:[%s1 + $0x8] sm:$0x1]
    %v39 = vld [vmem:[%s2] sm:$0xff]
    %v40 = vld [vmem:[%s2 + $0x8] sm:$0x1]
    %42 = vset.pattern.permute.xlu0 0
    %43 = vperm.xlu0 %42, %v39
    %v44 = vpop.permute.xlu0 %43
    %47 = vset.pattern.permute.xlu0 0
    %48 = vperm.xlu0 %47, %v40
    %v49 = vpop.permute.xlu0 %48
    %v52 = vcombine.high %v36, %v36
    %v54 = vunpack.c.l.s4 1983009808
    %v55 = vunpack.c.0.s8 %v54
    %v56 = vlaneseq
    %v57 = vshrl.u32 %v56, 7
    %v58 = vsub.s32 %v55, %v57
    %v59 = vrot.slane %v36, %v58
    %v61 = vunpack.c.l.s4 1983009808
    %v62 = vunpack.c.0.s8 %v61
    %v63 = vlaneseq
    %v64 = vshrl.u32 %v63, 7
    %v65 = vsub.s32 %v62, %v64
    %v66 = vrot.slane %v52, %v65
    %v67 = vcombine.high %v59, %v59
    %v68 = vcombine.high %v66, %v66
    %vm69 = vcmask 15360
    %v71 = vsel %vm69, %v37, 0
    %v74 = vsel %vm69, %v38, 0
    %vm76 = vcmask 1041408
    %v77 = vsel %vm76, %v59, 0
    %v79 = vsel %vm76, %v67, 0
    %v81 = vsel %vm76, %v66, 0
    %v83 = vsel %vm76, %v68, 0
    %85 = vmatprep.subr.mxu0 %v79
    %86 = vmatpush1.msra.mxu0 %v77
    %87 = vmatprep.subr.mxu0 0.0
    %88 = vmatpush1.msra.mxu0 0.0
    %89 = vmatprep.subr.mxu0 0.0
    %90 = vmatpush1.msra.mxu0 0.0
    %91 = vmatprep.subr.mxu0 0.0
    %92 = vmatpush1.msra.mxu0 0.0
    %93 = vmatprep.subr.mxu0 0.0
    %94 = vmatpush1.msra.mxu0 0.0
    %95 = vmatprep.subr.mxu0 0.0
    %96 = vmatpush1.msra.mxu0 0.0
    %97 = vmatprep.subr.mxu0 0.0
    %98 = vmatpush1.msra.mxu0 0.0
    %99 = vmatprep.subr.mxu0 0.0
    %100 = vmatpush1.msra.mxu0 0.0
    %101 = vmatprep.subr.mxu0 0.0
    %102 = vmatpush1.msra.mxu0 0.0
    %103 = vmatprep.subr.mxu0 0.0
    %104 = vmatpush1.msra.mxu0 0.0
    %105 = vmatprep.subr.mxu0 0.0
    %106 = vmatpush1.msra.mxu0 0.0
    %107 = vmatprep.subr.mxu0 0.0
    %108 = vmatpush1.msra.mxu0 0.0
    %109 = vmatprep.subr.mxu0 0.0
    %110 = vmatpush1.msra.mxu0 0.0
    %111 = vmatprep.subr.mxu0 0.0
    %112 = vmatpush1.msra.mxu0 0.0
    %113 = vmatprep.subr.mxu0 0.0
    %114 = vmatpush1.msra.mxu0 0.0
    %115 = vmatprep.subr.mxu0 0.0
    %116 = vmatpush1.msra.mxu0 0.0
    %117 = vmatprep.subr.mxu0 0.0
    %118 = vmatpush1.msra.mxu0 0.0
    %119 = vmatprep.subr.mxu0 0.0
    %120 = vmatpush1.msra.mxu0 0.0
    %121 = vmatprep.subr.mxu0 0.0
    %122 = vmatpush1.msra.mxu0 0.0
    %123 = vmatprep.subr.mxu0 0.0
    %124 = vmatpush1.msra.mxu0 0.0
    %125 = vmatprep.subr.mxu0 0.0
    %126 = vmatpush1.msra.mxu0 0.0
    %127 = vmatprep.subr.mxu0 0.0
    %128 = vmatpush1.msra.mxu0 0.0
    %129 = vmatprep.subr.mxu0 0.0
    %130 = vmatpush1.msra.mxu0 0.0
    %131 = vmatprep.subr.mxu0 0.0
    %132 = vmatpush1.msra.mxu0 0.0
    %133 = vmatprep.subr.mxu0 0.0
    %134 = vmatpush1.msra.mxu0 0.0
    %135 = vmatprep.subr.mxu0 0.0
    %136 = vmatpush1.msra.mxu0 0.0
    %137 = vmatprep.subr.mxu0 0.0
    %138 = vmatpush1.msra.mxu0 0.0
    %139 = vmatprep.subr.mxu0 0.0
    %140 = vmatpush1.msra.mxu0 0.0
    %141 = vmatprep.subr.mxu0 0.0
    %142 = vmatpush1.msra.mxu0 0.0
    %143 = vmatprep.subr.mxu0 0.0
    %144 = vmatpush1.msra.mxu0 0.0
    %145 = vmatprep.subr.mxu0 0.0
    %146 = vmatpush1.msra.mxu0 0.0
    %147 = vmatprep.subr.mxu0 0.0
    %148 = vmatpush1.msra.mxu0 0.0
    %149 = vmatprep.mubr.f32.mxu0 0.0
    %150 = vmatmul.mubr.f32.gmra.mrb[0].mxu0 %v71
    %v151 = vpop.f32.mrb[0].mxu0
    %v152 = vadd.f32 %v44, %v151
    %v153 = vpop.f32.mrb[0].mxu0
    %v154 = vadd.f32 %v44, %v153
    %155 = vmatprep.mubr.f32.mxu0 0.0
    %156 = vmatmul.mubr.f32.gmra.mrb[0].mxu0 %v74
    %v157 = vpop.f32.mrb[0].mxu0
    %v158 = vadd.f32 %v49, %v157
    %v159 = vpop.f32.mrb[0].mxu0
    %v160 = vadd.f32 %v49, %v159
    %161 = vdwg.mxu0
    %162 = vmatprep.subr.mxu0 %v83
    %163 = vmatpush1.msra.mxu0 %v81
    %164 = vmatprep.subr.mxu0 0.0
    %165 = vmatpush1.msra.mxu0 0.0
    %166 = vmatprep.subr.mxu0 0.0
    %167 = vmatpush1.msra.mxu0 0.0
    %168 = vmatprep.subr.mxu0 0.0
    %169 = vmatpush1.msra.mxu0 0.0
    %170 = vmatprep.subr.mxu0 0.0
    %171 = vmatpush1.msra.mxu0 0.0
    %172 = vmatprep.subr.mxu0 0.0
    %173 = vmatpush1.msra.mxu0 0.0
    %174 = vmatprep.subr.mxu0 0.0
    %175 = vmatpush1.msra.mxu0 0.0
    %176 = vmatprep.subr.mxu0 0.0
    %177 = vmatpush1.msra.mxu0 0.0
    %178 = vmatprep.subr.mxu0 0.0
    %179 = vmatpush1.msra.mxu0 0.0
    %180 = vmatprep.subr.mxu0 0.0
    %181 = vmatpush1.msra.mxu0 0.0
    %182 = vmatprep.subr.mxu0 0.0
    %183 = vmatpush1.msra.mxu0 0.0
    %184 = vmatprep.subr.mxu0 0.0
    %185 = vmatpush1.msra.mxu0 0.0
    %186 = vmatprep.subr.mxu0 0.0
    %187 = vmatpush1.msra.mxu0 0.0
    %188 = vmatprep.subr.mxu0 0.0
    %189 = vmatpush1.msra.mxu0 0.0
    %190 = vmatprep.subr.mxu0 0.0
    %191 = vmatpush1.msra.mxu0 0.0
    %192 = vmatprep.subr.mxu0 0.0
    %193 = vmatpush1.msra.mxu0 0.0
    %194 = vmatprep.subr.mxu0 0.0
    %195 = vmatpush1.msra.mxu0 0.0
    %196 = vmatprep.subr.mxu0 0.0
    %197 = vmatpush1.msra.mxu0 0.0
    %198 = vmatprep.subr.mxu0 0.0
    %199 = vmatpush1.msra.mxu0 0.0
    %200 = vmatprep.subr.mxu0 0.0
    %201 = vmatpush1.msra.mxu0 0.0
    %202 = vmatprep.subr.mxu0 0.0
    %203 = vmatpush1.msra.mxu0 0.0
    %204 = vmatprep.subr.mxu0 0.0
    %205 = vmatpush1.msra.mxu0 0.0
    %206 = vmatprep.subr.mxu0 0.0
    %207 = vmatpush1.msra.mxu0 0.0
    %208 = vmatprep.subr.mxu0 0.0
    %209 = vmatpush1.msra.mxu0 0.0
    %210 = vmatprep.subr.mxu0 0.0
    %211 = vmatpush1.msra.mxu0 0.0
    %212 = vmatprep.subr.mxu0 0.0
    %213 = vmatpush1.msra.mxu0 0.0
    %214 = vmatprep.subr.mxu0 0.0
    %215 = vmatpush1.msra.mxu0 0.0
    %216 = vmatprep.subr.mxu0 0.0
    %217 = vmatpush1.msra.mxu0 0.0
    %218 = vmatprep.subr.mxu0 0.0
    %219 = vmatpush1.msra.mxu0 0.0
    %220 = vmatprep.subr.mxu0 0.0
    %221 = vmatpush1.msra.mxu0 0.0
    %222 = vmatprep.subr.mxu0 0.0
    %223 = vmatpush1.msra.mxu0 0.0
    %224 = vmatprep.subr.mxu0 0.0
    %225 = vmatpush1.msra.mxu0 0.0
    %226 = vmatprep.mubr.f32.mxu0 0.0
    %227 = vmatmul.mubr.f32.gmra.mrb[0].mxu0 %v71
    %v228 = vpop.f32.mrb[0].mxu0
    %v229 = vadd.f32 %v44, %v228
    %v230 = vpop.f32.mrb[0].mxu0
    %v231 = vadd.f32 %v44, %v230
    %232 = vmatprep.mubr.f32.mxu0 0.0
    %233 = vmatmul.mubr.f32.gmra.mrb[0].mxu0 %v74
    %v234 = vpop.f32.mrb[0].mxu0
    %v235 = vadd.f32 %v49, %v234
    %v236 = vpop.f32.mrb[0].mxu0
    %v237 = vadd.f32 %v49, %v236
    %238 = vdwg.mxu0
    %v239 = vmax.f32 %v152, 0.0
    %v240 = vmax.f32 %v154, 0.0
    %v241 = vmax.f32 %v229, 0.0
    %v242 = vmax.f32 %v231, 0.0
    %v243 = vmax.f32 %v158, 0.0
    %v244 = vmax.f32 %v160, 0.0
    %v245 = vmax.f32 %v235, 0.0
    %v246 = vmax.f32 %v237, 0.0
    %v247 = vld [vmem:[%s3] sm:$0x3]
    %v248 = vld [vmem:[%s4] sm:$0x3]
    %250 = vset.pattern.permute.xlu0 0
    %251 = vperm.xlu0 %250, %v248
    %v252 = vpop.permute.xlu0 %251
    %vm254 = vcmask 72704
    %v256 = vsel %vm254, %v247, 0
    %vm258 = vcmask 1040384
    %v260 = vsel %vm258, %v243, 0
    %v263 = vsel %vm258, %v244, 0
    %v266 = vsel %vm258, %v245, 0
    %v269 = vsel %vm258, %v246, 0
    %271 = vmatprep.subr.mxu0 %v240
    %272 = vmatpush1.msra.mxu0 %v239
    %273 = vmatprep.subr.mxu0 %v263
    %274 = vmatpush1.msra.mxu0 %v260
    %275 = vmatprep.subr.mxu0 0.0
    %276 = vmatpush1.msra.mxu0 0.0
    %277 = vmatprep.subr.mxu0 0.0
    %278 = vmatpush1.msra.mxu0 0.0
    %279 = vmatprep.subr.mxu0 0.0
    %280 = vmatpush1.msra.mxu0 0.0
    %281 = vmatprep.subr.mxu0 0.0
    %282 = vmatpush1.msra.mxu0 0.0
    %283 = vmatprep.subr.mxu0 0.0
    %284 = vmatpush1.msra.mxu0 0.0
    %285 = vmatprep.subr.mxu0 0.0
    %286 = vmatpush1.msra.mxu0 0.0
    %287 = vmatprep.subr.mxu0 0.0
    %288 = vmatpush1.msra.mxu0 0.0
    %289 = vmatprep.subr.mxu0 0.0
    %290 = vmatpush1.msra.mxu0 0.0
    %291 = vmatprep.subr.mxu0 0.0
    %292 = vmatpush1.msra.mxu0 0.0
    %293 = vmatprep.subr.mxu0 0.0
    %294 = vmatpush1.msra.mxu0 0.0
    %295 = vmatprep.subr.mxu0 0.0
    %296 = vmatpush1.msra.mxu0 0.0
    %297 = vmatprep.subr.mxu0 0.0
    %298 = vmatpush1.msra.mxu0 0.0
    %299 = vmatprep.subr.mxu0 0.0
    %300 = vmatpush1.msra.mxu0 0.0
    %301 = vmatprep.subr.mxu0 0.0
    %302 = vmatpush1.msra.mxu0 0.0
    %303 = vmatprep.subr.mxu0 0.0
    %304 = vmatpush1.msra.mxu0 0.0
    %305 = vmatprep.subr.mxu0 0.0
    %306 = vmatpush1.msra.mxu0 0.0
    %307 = vmatprep.subr.mxu0 0.0
    %308 = vmatpush1.msra.mxu0 0.0
    %309 = vmatprep.subr.mxu0 0.0
    %310 = vmatpush1.msra.mxu0 0.0
    %311 = vmatprep.subr.mxu0 0.0
    %312 = vmatpush1.msra.mxu0 0.0
    %313 = vmatprep.subr.mxu0 0.0
    %314 = vmatpush1.msra.mxu0 0.0
    %315 = vmatprep.subr.mxu0 0.0
    %316 = vmatpush1.msra.mxu0 0.0
    %317 = vmatprep.subr.mxu0 0.0
    %318 = vmatpush1.msra.mxu0 0.0
    %319 = vmatprep.subr.mxu0 0.0
    %320 = vmatpush1.msra.mxu0 0.0
    %321 = vmatprep.subr.mxu0 0.0
    %322 = vmatpush1.msra.mxu0 0.0
    %323 = vmatprep.subr.mxu0 0.0
    %324 = vmatpush1.msra.mxu0 0.0
    %325 = vmatprep.subr.mxu0 0.0
    %326 = vmatpush1.msra.mxu0 0.0
    %327 = vmatprep.subr.mxu0 0.0
    %328 = vmatpush1.msra.mxu0 0.0
    %329 = vmatprep.subr.mxu0 0.0
    %330 = vmatpush1.msra.mxu0 0.0
    %331 = vmatprep.subr.mxu0 0.0
    %332 = vmatpush1.msra.mxu0 0.0
    %333 = vmatprep.subr.mxu0 0.0
    %334 = vmatpush1.msra.mxu0 0.0
    %335 = vmatprep.mubr.f32.mxu0 0.0
    %336 = vmatmul.mubr.f32.gmra.mrb[0].mxu0 %v256
    %v337 = vpop.f32.mrb[0].mxu0
    %v338 = vadd.f32 %v252, %v337
    %v339 = vpop.f32.mrb[0].mxu0
    %v340 = vadd.f32 %v252, %v339
    %341 = vdwg.mxu0
    %342 = vmatprep.subr.mxu0 %v242
    %343 = vmatpush1.msra.mxu0 %v241
    %344 = vmatprep.subr.mxu0 %v269
    %345 = vmatpush1.msra.mxu0 %v266
    %346 = vmatprep.subr.mxu0 0.0
    %347 = vmatpush1.msra.mxu0 0.0
    %348 = vmatprep.subr.mxu0 0.0
    %349 = vmatpush1.msra.mxu0 0.0
    %350 = vmatprep.subr.mxu0 0.0
    %351 = vmatpush1.msra.mxu0 0.0
    %352 = vmatprep.subr.mxu0 0.0
    %353 = vmatpush1.msra.mxu0 0.0
    %354 = vmatprep.subr.mxu0 0.0
    %355 = vmatpush1.msra.mxu0 0.0
    %356 = vmatprep.subr.mxu0 0.0
    %357 = vmatpush1.msra.mxu0 0.0
    %358 = vmatprep.subr.mxu0 0.0
    %359 = vmatpush1.msra.mxu0 0.0
    %360 = vmatprep.subr.mxu0 0.0
    %361 = vmatpush1.msra.mxu0 0.0
    %362 = vmatprep.subr.mxu0 0.0
    %363 = vmatpush1.msra.mxu0 0.0
    %364 = vmatprep.subr.mxu0 0.0
    %365 = vmatpush1.msra.mxu0 0.0
    %366 = vmatprep.subr.mxu0 0.0
    %367 = vmatpush1.msra.mxu0 0.0
    %368 = vmatprep.subr.mxu0 0.0
    %369 = vmatpush1.msra.mxu0 0.0
    %370 = vmatprep.subr.mxu0 0.0
    %371 = vmatpush1.msra.mxu0 0.0
    %372 = vmatprep.subr.mxu0 0.0
    %373 = vmatpush1.msra.mxu0 0.0
    %374 = vmatprep.subr.mxu0 0.0
    %375 = vmatpush1.msra.mxu0 0.0
    %376 = vmatprep.subr.mxu0 0.0
    %377 = vmatpush1.msra.mxu0 0.0
    %378 = vmatprep.subr.mxu0 0.0
    %379 = vmatpush1.msra.mxu0 0.0
    %380 = vmatprep.subr.mxu0 0.0
    %381 = vmatpush1.msra.mxu0 0.0
    %382 = vmatprep.subr.mxu0 0.0
    %383 = vmatpush1.msra.mxu0 0.0
    %384 = vmatprep.subr.mxu0 0.0
    %385 = vmatpush1.msra.mxu0 0.0
    %386 = vmatprep.subr.mxu0 0.0
    %387 = vmatpush1.msra.mxu0 0.0
    %388 = vmatprep.subr.mxu0 0.0
    %389 = vmatpush1.msra.mxu0 0.0
    %390 = vmatprep.subr.mxu0 0.0
    %391 = vmatpush1.msra.mxu0 0.0
    %392 = vmatprep.subr.mxu0 0.0
    %393 = vmatpush1.msra.mxu0 0.0
    %394 = vmatprep.subr.mxu0 0.0
    %395 = vmatpush1.msra.mxu0 0.0
    %396 = vmatprep.subr.mxu0 0.0
    %397 = vmatpush1.msra.mxu0 0.0
    %398 = vmatprep.subr.mxu0 0.0
    %399 = vmatpush1.msra.mxu0 0.0
    %400 = vmatprep.subr.mxu0 0.0
    %401 = vmatpush1.msra.mxu0 0.0
    %402 = vmatprep.subr.mxu0 0.0
    %403 = vmatpush1.msra.mxu0 0.0
    %404 = vmatprep.subr.mxu0 0.0
    %405 = vmatpush1.msra.mxu0 0.0
    %406 = vmatprep.mubr.f32.mxu0 0.0
    %407 = vmatmul.mubr.f32.gmra.mrb[0].mxu0 %v256
    %v408 = vpop.f32.mrb[0].mxu0
    %v409 = vadd.f32 %v252, %v408
    %v410 = vpop.f32.mrb[0].mxu0
    %v411 = vadd.f32 %v252, %v410
    %412 = vdwg.mxu0
    %v413 = vsel %vm76, %v338, -inf
    %v414 = vrot.slane %v413, 4
    %v415 = vmax.f32 %v413, %v414
    %v416 = vrot.slane %v415, 2
    %v417 = vmax.f32 %v415, %v416
    %v418 = vrot.slane %v417, 1
    %v419 = vmax.f32 %v417, %v418
    %v420 = vsel %vm76, %v340, -inf
    %v421 = vrot.slane %v420, 4
    %v422 = vmax.f32 %v420, %v421
    %v423 = vrot.slane %v422, 2
    %v424 = vmax.f32 %v422, %v423
    %v425 = vrot.slane %v424, 1
    %v426 = vmax.f32 %v424, %v425
    %v427 = vsel %vm76, %v409, -inf
    %v428 = vrot.slane %v427, 4
    %v429 = vmax.f32 %v427, %v428
    %v430 = vrot.slane %v429, 2
    %v431 = vmax.f32 %v429, %v430
    %v432 = vrot.slane %v431, 1
    %v433 = vmax.f32 %v431, %v432
    %v434 = vsel %vm76, %v411, -inf
    %v435 = vrot.slane %v434, 4
    %v436 = vmax.f32 %v434, %v435
    %v437 = vrot.slane %v436, 2
    %v438 = vmax.f32 %v436, %v437
    %v439 = vrot.slane %v438, 1
    %v440 = vmax.f32 %v438, %v439
    %v441 = vsub.f32 %v338, %v419
    %v442 = vsub.f32 %v340, %v426
    %v443 = vsub.f32 %v409, %v433
    %v444 = vsub.f32 %v411, %v440
    %v445 = vmul.f32 %v441, 1.442695
    %v446 = vpow.pop %v445
    %v447 = vmul.f32 %v442, 1.442695
    %v448 = vpow.pop %v447
    %v449 = vmul.f32 %v443, 1.442695
    %v450 = vpow.pop %v449
    %v451 = vmul.f32 %v444, 1.442695
    %v452 = vpow.pop %v451
    %v453 = vsel %vm76, %v446, 0.0
    %v454 = vrot.slane %v453, 4
    %v455 = vadd.f32 %v453, %v454
    %v456 = vrot.slane %v455, 2
    %v457 = vadd.f32 %v455, %v456
    %v458 = vrot.slane %v457, 1
    %v459 = vadd.f32 %v457, %v458
    %v460 = vsel %vm76, %v448, 0.0
    %v461 = vrot.slane %v460, 4
    %v462 = vadd.f32 %v460, %v461
    %v463 = vrot.slane %v462, 2
    %v464 = vadd.f32 %v462, %v463
    %v465 = vrot.slane %v464, 1
    %v466 = vadd.f32 %v464, %v465
    %v467 = vsel %vm76, %v450, 0.0
    %v468 = vrot.slane %v467, 4
    %v469 = vadd.f32 %v467, %v468
    %v470 = vrot.slane %v469, 2
    %v471 = vadd.f32 %v469, %v470
    %v472 = vrot.slane %v471, 1
    %v473 = vadd.f32 %v471, %v472
    %v474 = vsel %vm76, %v452, 0.0
    %v475 = vrot.slane %v474, 4
    %v476 = vadd.f32 %v474, %v475
    %v477 = vrot.slane %v476, 2
    %v478 = vadd.f32 %v476, %v477
    %v479 = vrot.slane %v478, 1
    %v480 = vadd.f32 %v478, %v479
    %v481 = vrcp.pop %v459
    %v482 = vrcp.pop %v466
    %v483 = vrcp.pop %v473
    %v484 = vrcp.pop %v480
    %v485 = vmul.f32 %v446, %v481
    %v486 = vmul.f32 %v448, %v482
    %v487 = vmul.f32 %v450, %v483
    %v488 = vmul.f32 %v452, %v484
    %v489 = vld [vmem:[%s5] sm:$0xff]
    %v490 = vld [vmem:[%s5 + $0x8] sm:$0x1]
    %v491 = vld [vmem:[%s6] sm:$0xff]
    %v492 = vld [vmem:[%s6 + $0x8] sm:$0x1]
    %494 = vset.pattern.permute.xlu0 0
    %495 = vperm.xlu0 %494, %v491
    %v496 = vpop.permute.xlu0 %495
    %499 = vset.pattern.permute.xlu0 0
    %500 = vperm.xlu0 %499, %v492
    %v501 = vpop.permute.xlu0 %500
    %v504 = vsel %vm69, %v489, 0
    %v507 = vsel %vm69, %v490, 0
    %v510 = vsel %vm76, %v485, 0
    %v513 = vsel %vm76, %v486, 0
    %v516 = vsel %vm76, %v487, 0
    %v519 = vsel %vm76, %v488, 0
    %521 = vmatprep.subr.mxu0 %v513
    %522 = vmatpush1.msra.mxu0 %v510
    %523 = vmatprep.subr.mxu0 0.0
    %524 = vmatpush1.msra.mxu0 0.0
    %525 = vmatprep.subr.mxu0 0.0
    %526 = vmatpush1.msra.mxu0 0.0
    %527 = vmatprep.subr.mxu0 0.0
    %528 = vmatpush1.msra.mxu0 0.0
    %529 = vmatprep.subr.mxu0 0.0
    %530 = vmatpush1.msra.mxu0 0.0
    %531 = vmatprep.subr.mxu0 0.0
    %532 = vmatpush1.msra.mxu0 0.0
    %533 = vmatprep.subr.mxu0 0.0
    %534 = vmatpush1.msra.mxu0 0.0
    %535 = vmatprep.subr.mxu0 0.0
    %536 = vmatpush1.msra.mxu0 0.0
    %537 = vmatprep.subr.mxu0 0.0
    %538 = vmatpush1.msra.mxu0 0.0
    %539 = vmatprep.subr.mxu0 0.0
    %540 = vmatpush1.msra.mxu0 0.0
    %541 = vmatprep.subr.mxu0 0.0
    %542 = vmatpush1.msra.mxu0 0.0
    %543 = vmatprep.subr.mxu0 0.0
    %544 = vmatpush1.msra.mxu0 0.0
    %545 = vmatprep.subr.mxu0 0.0
    %546 = vmatpush1.msra.mxu0 0.0
    %547 = vmatprep.subr.mxu0 0.0
    %548 = vmatpush1.msra.mxu0 0.0
    %549 = vmatprep.subr.mxu0 0.0
    %550 = vmatpush1.msra.mxu0 0.0
    %551 = vmatprep.subr.mxu0 0.0
    %552 = vmatpush1.msra.mxu0 0.0
    %553 = vmatprep.subr.mxu0 0.0
    %554 = vmatpush1.msra.mxu0 0.0
    %555 = vmatprep.subr.mxu0 0.0
    %556 = vmatpush1.msra.mxu0 0.0
    %557 = vmatprep.subr.mxu0 0.0
    %558 = vmatpush1.msra.mxu0 0.0
    %559 = vmatprep.subr.mxu0 0.0
    %560 = vmatpush1.msra.mxu0 0.0
    %561 = vmatprep.subr.mxu0 0.0
    %562 = vmatpush1.msra.mxu0 0.0
    %563 = vmatprep.subr.mxu0 0.0
    %564 = vmatpush1.msra.mxu0 0.0
    %565 = vmatprep.subr.mxu0 0.0
    %566 = vmatpush1.msra.mxu0 0.0
    %567 = vmatprep.subr.mxu0 0.0
    %568 = vmatpush1.msra.mxu0 0.0
    %569 = vmatprep.subr.mxu0 0.0
    %570 = vmatpush1.msra.mxu0 0.0
    %571 = vmatprep.subr.mxu0 0.0
    %572 = vmatpush1.msra.mxu0 0.0
    %573 = vmatprep.subr.mxu0 0.0
    %574 = vmatpush1.msra.mxu0 0.0
    %575 = vmatprep.subr.mxu0 0.0
    %576 = vmatpush1.msra.mxu0 0.0
    %577 = vmatprep.subr.mxu0 0.0
    %578 = vmatpush1.msra.mxu0 0.0
    %579 = vmatprep.subr.mxu0 0.0
    %580 = vmatpush1.msra.mxu0 0.0
    %581 = vmatprep.subr.mxu0 0.0
    %582 = vmatpush1.msra.mxu0 0.0
    %583 = vmatprep.subr.mxu0 0.0
    %584 = vmatpush1.msra.mxu0 0.0
    %585 = vmatprep.mubr.f32.mxu0 0.0
    %586 = vmatmul.mubr.f32.gmra.mrb[0].mxu0 %v504
    %v587 = vpop.f32.mrb[0].mxu0
    %v588 = vadd.f32 %v496, %v587
    %v589 = vpop.f32.mrb[0].mxu0
    %v590 = vadd.f32 %v496, %v589
    %591 = vmatprep.mubr.f32.mxu0 0.0
    %592 = vmatmul.mubr.f32.gmra.mrb[0].mxu0 %v507
    %v593 = vpop.f32.mrb[0].mxu0
    %v594 = vadd.f32 %v501, %v593
    %v595 = vpop.f32.mrb[0].mxu0
    %v596 = vadd.f32 %v501, %v595
    %597 = vdwg.mxu0
    %598 = vmatprep.subr.mxu0 %v519
    %599 = vmatpush1.msra.mxu0 %v516
    %600 = vmatprep.subr.mxu0 0.0
    %601 = vmatpush1.msra.mxu0 0.0
    %602 = vmatprep.subr.mxu0 0.0
    %603 = vmatpush1.msra.mxu0 0.0
    %604 = vmatprep.subr.mxu0 0.0
    %605 = vmatpush1.msra.mxu0 0.0
    %606 = vmatprep.subr.mxu0 0.0
    %607 = vmatpush1.msra.mxu0 0.0
    %608 = vmatprep.subr.mxu0 0.0
    %609 = vmatpush1.msra.mxu0 0.0
    %610 = vmatprep.subr.mxu0 0.0
    %611 = vmatpush1.msra.mxu0 0.0
    %612 = vmatprep.subr.mxu0 0.0
    %613 = vmatpush1.msra.mxu0 0.0
    %614 = vmatprep.subr.mxu0 0.0
    %615 = vmatpush1.msra.mxu0 0.0
    %616 = vmatprep.subr.mxu0 0.0
    %617 = vmatpush1.msra.mxu0 0.0
    %618 = vmatprep.subr.mxu0 0.0
    %619 = vmatpush1.msra.mxu0 0.0
    %620 = vmatprep.subr.mxu0 0.0
    %621 = vmatpush1.msra.mxu0 0.0
    %622 = vmatprep.subr.mxu0 0.0
    %623 = vmatpush1.msra.mxu0 0.0
    %624 = vmatprep.subr.mxu0 0.0
    %625 = vmatpush1.msra.mxu0 0.0
    %626 = vmatprep.subr.mxu0 0.0
    %627 = vmatpush1.msra.mxu0 0.0
    %628 = vmatprep.subr.mxu0 0.0
    %629 = vmatpush1.msra.mxu0 0.0
    %630 = vmatprep.subr.mxu0 0.0
    %631 = vmatpush1.msra.mxu0 0.0
    %632 = vmatprep.subr.mxu0 0.0
    %633 = vmatpush1.msra.mxu0 0.0
    %634 = vmatprep.subr.mxu0 0.0
    %635 = vmatpush1.msra.mxu0 0.0
    %636 = vmatprep.subr.mxu0 0.0
    %637 = vmatpush1.msra.mxu0 0.0
    %638 = vmatprep.subr.mxu0 0.0
    %639 = vmatpush1.msra.mxu0 0.0
    %640 = vmatprep.subr.mxu0 0.0
    %641 = vmatpush1.msra.mxu0 0.0
    %642 = vmatprep.subr.mxu0 0.0
    %643 = vmatpush1.msra.mxu0 0.0
    %644 = vmatprep.subr.mxu0 0.0
    %645 = vmatpush1.msra.mxu0 0.0
    %646 = vmatprep.subr.mxu0 0.0
    %647 = vmatpush1.msra.mxu0 0.0
    %648 = vmatprep.subr.mxu0 0.0
    %649 = vmatpush1.msra.mxu0 0.0
    %650 = vmatprep.subr.mxu0 0.0
    %651 = vmatpush1.msra.mxu0 0.0
    %652 = vmatprep.subr.mxu0 0.0
    %653 = vmatpush1.msra.mxu0 0.0
    %654 = vmatprep.subr.mxu0 0.0
    %655 = vmatpush1.msra.mxu0 0.0
    %656 = vmatprep.subr.mxu0 0.0
    %657 = vmatpush1.msra.mxu0 0.0
    %658 = vmatprep.subr.mxu0 0.0
    %659 = vmatpush1.msra.mxu0 0.0
    %660 = vmatprep.subr.mxu0 0.0
    %661 = vmatpush1.msra.mxu0 0.0
    %662 = vmatprep.mubr.f32.mxu0 0.0
    %663 = vmatmul.mubr.f32.gmra.mrb[0].mxu0 %v504
    %v664 = vpop.f32.mrb[0].mxu0
    %v665 = vadd.f32 %v496, %v664
    %v666 = vpop.f32.mrb[0].mxu0
    %v667 = vadd.f32 %v496, %v666
    %668 = vmatprep.mubr.f32.mxu0 0.0
    %669 = vmatmul.mubr.f32.gmra.mrb[0].mxu0 %v507
    %v670 = vpop.f32.mrb[0].mxu0
    %v671 = vadd.f32 %v501, %v670
    %v672 = vpop.f32.mrb[0].mxu0
    %v673 = vadd.f32 %v501, %v672
    %674 = vdwg.mxu0
    %v675 = vmax.f32 %v588, 0.0
    %v676 = vmax.f32 %v590, 0.0
    %v677 = vmax.f32 %v665, 0.0
    %v678 = vmax.f32 %v667, 0.0
    %v679 = vmax.f32 %v594, 0.0
    %v680 = vmax.f32 %v596, 0.0
    %v681 = vmax.f32 %v671, 0.0
    %v682 = vmax.f32 %v673, 0.0
    %v683 = vld [vmem:[%s7] sm:$0x3]
    %v684 = vld [vmem:[%s8] sm:$0x3]
    %686 = vset.pattern.permute.xlu0 0
    %687 = vperm.xlu0 %686, %v684
    %v688 = vpop.permute.xlu0 %687
    %v691 = vsel %vm254, %v683, 0
    %v694 = vsel %vm258, %v679, 0
    %v697 = vsel %vm258, %v680, 0
    %v700 = vsel %vm258, %v681, 0
    %v703 = vsel %vm258, %v682, 0
    %705 = vmatprep.subr.mxu0 %v676
    %706 = vmatpush1.msra.mxu0 %v675
    %707 = vmatprep.subr.mxu0 %v697
    %708 = vmatpush1.msra.mxu0 %v694
    %709 = vmatprep.subr.mxu0 0.0
    %710 = vmatpush1.msra.mxu0 0.0
    %711 = vmatprep.subr.mxu0 0.0
    %712 = vmatpush1.msra.mxu0 0.0
    %713 = vmatprep.subr.mxu0 0.0
    %714 = vmatpush1.msra.mxu0 0.0
    %715 = vmatprep.subr.mxu0 0.0
    %716 = vmatpush1.msra.mxu0 0.0
    %717 = vmatprep.subr.mxu0 0.0
    %718 = vmatpush1.msra.mxu0 0.0
    %719 = vmatprep.subr.mxu0 0.0
    %720 = vmatpush1.msra.mxu0 0.0
    %721 = vmatprep.subr.mxu0 0.0
    %722 = vmatpush1.msra.mxu0 0.0
    %723 = vmatprep.subr.mxu0 0.0
    %724 = vmatpush1.msra.mxu0 0.0
    %725 = vmatprep.subr.mxu0 0.0
    %726 = vmatpush1.msra.mxu0 0.0
    %727 = vmatprep.subr.mxu0 0.0
    %728 = vmatpush1.msra.mxu0 0.0
    %729 = vmatprep.subr.mxu0 0.0
    %730 = vmatpush1.msra.mxu0 0.0
    %731 = vmatprep.subr.mxu0 0.0
    %732 = vmatpush1.msra.mxu0 0.0
    %733 = vmatprep.subr.mxu0 0.0
    %734 = vmatpush1.msra.mxu0 0.0
    %735 = vmatprep.subr.mxu0 0.0
    %736 = vmatpush1.msra.mxu0 0.0
    %737 = vmatprep.subr.mxu0 0.0
    %738 = vmatpush1.msra.mxu0 0.0
    %739 = vmatprep.subr.mxu0 0.0
    %740 = vmatpush1.msra.mxu0 0.0
    %741 = vmatprep.subr.mxu0 0.0
    %742 = vmatpush1.msra.mxu0 0.0
    %743 = vmatprep.subr.mxu0 0.0
    %744 = vmatpush1.msra.mxu0 0.0
    %745 = vmatprep.subr.mxu0 0.0
    %746 = vmatpush1.msra.mxu0 0.0
    %747 = vmatprep.subr.mxu0 0.0
    %748 = vmatpush1.msra.mxu0 0.0
    %749 = vmatprep.subr.mxu0 0.0
    %750 = vmatpush1.msra.mxu0 0.0
    %751 = vmatprep.subr.mxu0 0.0
    %752 = vmatpush1.msra.mxu0 0.0
    %753 = vmatprep.subr.mxu0 0.0
    %754 = vmatpush1.msra.mxu0 0.0
    %755 = vmatprep.subr.mxu0 0.0
    %756 = vmatpush1.msra.mxu0 0.0
    %757 = vmatprep.subr.mxu0 0.0
    %758 = vmatpush1.msra.mxu0 0.0
    %759 = vmatprep.subr.mxu0 0.0
    %760 = vmatpush1.msra.mxu0 0.0
    %761 = vmatprep.subr.mxu0 0.0
    %762 = vmatpush1.msra.mxu0 0.0
    %763 = vmatprep.subr.mxu0 0.0
    %764 = vmatpush1.msra.mxu0 0.0
    %765 = vmatprep.subr.mxu0 0.0
    %766 = vmatpush1.msra.mxu0 0.0
    %767 = vmatprep.subr.mxu0 0.0
    %768 = vmatpush1.msra.mxu0 0.0
    %769 = vmatprep.mubr.f32.mxu0 0.0
    %770 = vmatmul.mubr.f32.gmra.mrb[0].mxu0 %v691
    %v771 = vpop.f32.mrb[0].mxu0
    %v772 = vadd.f32 %v688, %v771
    %v773 = vpop.f32.mrb[0].mxu0
    %v774 = vadd.f32 %v688, %v773
    %775 = vdwg.mxu0
    %776 = vmatprep.subr.mxu0 %v678
    %777 = vmatpush1.msra.mxu0 %v677
    %778 = vmatprep.subr.mxu0 %v703
    %779 = vmatpush1.msra.mxu0 %v700
    %780 = vmatprep.subr.mxu0 0.0
    %781 = vmatpush1.msra.mxu0 0.0
    %782 = vmatprep.subr.mxu0 0.0
    %783 = vmatpush1.msra.mxu0 0.0
    %784 = vmatprep.subr.mxu0 0.0
    %785 = vmatpush1.msra.mxu0 0.0
    %786 = vmatprep.subr.mxu0 0.0
    %787 = vmatpush1.msra.mxu0 0.0
    %788 = vmatprep.subr.mxu0 0.0
    %789 = vmatpush1.msra.mxu0 0.0
    %790 = vmatprep.subr.mxu0 0.0
    %791 = vmatpush1.msra.mxu0 0.0
    %792 = vmatprep.subr.mxu0 0.0
    %793 = vmatpush1.msra.mxu0 0.0
    %794 = vmatprep.subr.mxu0 0.0
    %795 = vmatpush1.msra.mxu0 0.0
    %796 = vmatprep.subr.mxu0 0.0
    %797 = vmatpush1.msra.mxu0 0.0
    %798 = vmatprep.subr.mxu0 0.0
    %799 = vmatpush1.msra.mxu0 0.0
    %800 = vmatprep.subr.mxu0 0.0
    %801 = vmatpush1.msra.mxu0 0.0
    %802 = vmatprep.subr.mxu0 0.0
    %803 = vmatpush1.msra.mxu0 0.0
    %804 = vmatprep.subr.mxu0 0.0
    %805 = vmatpush1.msra.mxu0 0.0
    %806 = vmatprep.subr.mxu0 0.0
    %807 = vmatpush1.msra.mxu0 0.0
    %808 = vmatprep.subr.mxu0 0.0
    %809 = vmatpush1.msra.mxu0 0.0
    %810 = vmatprep.subr.mxu0 0.0
    %811 = vmatpush1.msra.mxu0 0.0
    %812 = vmatprep.subr.mxu0 0.0
    %813 = vmatpush1.msra.mxu0 0.0
    %814 = vmatprep.subr.mxu0 0.0
    %815 = vmatpush1.msra.mxu0 0.0
    %816 = vmatprep.subr.mxu0 0.0
    %817 = vmatpush1.msra.mxu0 0.0
    %818 = vmatprep.subr.mxu0 0.0
    %819 = vmatpush1.msra.mxu0 0.0
    %820 = vmatprep.subr.mxu0 0.0
    %821 = vmatpush1.msra.mxu0 0.0
    %822 = vmatprep.subr.mxu0 0.0
    %823 = vmatpush1.msra.mxu0 0.0
    %824 = vmatprep.subr.mxu0 0.0
    %825 = vmatpush1.msra.mxu0 0.0
    %826 = vmatprep.subr.mxu0 0.0
    %827 = vmatpush1.msra.mxu0 0.0
    %828 = vmatprep.subr.mxu0 0.0
    %829 = vmatpush1.msra.mxu0 0.0
    %830 = vmatprep.subr.mxu0 0.0
    %831 = vmatpush1.msra.mxu0 0.0
    %832 = vmatprep.subr.mxu0 0.0
    %833 = vmatpush1.msra.mxu0 0.0
    %834 = vmatprep.subr.mxu0 0.0
    %835 = vmatpush1.msra.mxu0 0.0
    %836 = vmatprep.subr.mxu0 0.0
    %837 = vmatpush1.msra.mxu0 0.0
    %838 = vmatprep.subr.mxu0 0.0
    %839 = vmatpush1.msra.mxu0 0.0
    %840 = vmatprep.mubr.f32.mxu0 0.0
    %841 = vmatmul.mubr.f32.gmra.mrb[0].mxu0 %v691
    %v842 = vpop.f32.mrb[0].mxu0
    %v843 = vadd.f32 %v688, %v842
    %v844 = vpop.f32.mrb[0].mxu0
    %v845 = vadd.f32 %v688, %v844
    %846 = vdwg.mxu0
    %v847 = vsel %vm76, %v772, -inf
    %v848 = vrot.slane %v847, 4
    %v849 = vmax.f32 %v847, %v848
    %v850 = vrot.slane %v849, 2
    %v851 = vmax.f32 %v849, %v850
    %v852 = vrot.slane %v851, 1
    %v853 = vmax.f32 %v851, %v852
    %v854 = vsel %vm76, %v774, -inf
    %v855 = vrot.slane %v854, 4
    %v856 = vmax.f32 %v854, %v855
    %v857 = vrot.slane %v856, 2
    %v858 = vmax.f32 %v856, %v857
    %v859 = vrot.slane %v858, 1
    %v860 = vmax.f32 %v858, %v859
    %v861 = vsel %vm76, %v843, -inf
    %v862 = vrot.slane %v861, 4
    %v863 = vmax.f32 %v861, %v862
    %v864 = vrot.slane %v863, 2
    %v865 = vmax.f32 %v863, %v864
    %v866 = vrot.slane %v865, 1
    %v867 = vmax.f32 %v865, %v866
    %v868 = vsel %vm76, %v845, -inf
    %v869 = vrot.slane %v868, 4
    %v870 = vmax.f32 %v868, %v869
    %v871 = vrot.slane %v870, 2
    %v872 = vmax.f32 %v870, %v871
    %v873 = vrot.slane %v872, 1
    %v874 = vmax.f32 %v872, %v873
    %v875 = vsub.f32 %v772, %v853
    %v876 = vsub.f32 %v774, %v860
    %v877 = vsub.f32 %v843, %v867
    %v878 = vsub.f32 %v845, %v874
    %v879 = vmul.f32 %v875, 1.442695
    %v880 = vpow.pop %v879
    %v881 = vmul.f32 %v876, 1.442695
    %v882 = vpow.pop %v881
    %v883 = vmul.f32 %v877, 1.442695
    %v884 = vpow.pop %v883
    %v885 = vmul.f32 %v878, 1.442695
    %v886 = vpow.pop %v885
    %v887 = vsel %vm76, %v880, 0.0
    %v888 = vrot.slane %v887, 4
    %v889 = vadd.f32 %v887, %v888
    %v890 = vrot.slane %v889, 2
    %v891 = vadd.f32 %v889, %v890
    %v892 = vrot.slane %v891, 1
    %v893 = vadd.f32 %v891, %v892
    %v894 = vsel %vm76, %v882, 0.0
    %v895 = vrot.slane %v894, 4
    %v896 = vadd.f32 %v894, %v895
    %v897 = vrot.slane %v896, 2
    %v898 = vadd.f32 %v896, %v897
    %v899 = vrot.slane %v898, 1
    %v900 = vadd.f32 %v898, %v899
    %v901 = vsel %vm76, %v884, 0.0
    %v902 = vrot.slane %v901, 4
    %v903 = vadd.f32 %v901, %v902
    %v904 = vrot.slane %v903, 2
    %v905 = vadd.f32 %v903, %v904
    %v906 = vrot.slane %v905, 1
    %v907 = vadd.f32 %v905, %v906
    %v908 = vsel %vm76, %v886, 0.0
    %v909 = vrot.slane %v908, 4
    %v910 = vadd.f32 %v908, %v909
    %v911 = vrot.slane %v910, 2
    %v912 = vadd.f32 %v910, %v911
    %v913 = vrot.slane %v912, 1
    %v914 = vadd.f32 %v912, %v913
    %v915 = vrcp.pop %v893
    %v916 = vrcp.pop %v900
    %v917 = vrcp.pop %v907
    %v918 = vrcp.pop %v914
    %v919 = vmul.f32 %v880, %v915
    %v920 = vmul.f32 %v882, %v916
    %v921 = vmul.f32 %v884, %v917
    %v922 = vmul.f32 %v886, %v918
    %v927 = vcombine.low %v919, %v920
    %v928 = vcombine.low %v921, %v922
    %v930 = vunpack.c.l.s4 1983009808
    %v931 = vunpack.c.0.s8 %v930
    %v932 = vlaneseq
    %v933 = vshrl.u32 %v932, 7
    %v934 = vsub.s32 %v931, %v933
    %v935 = vrot.slane %v927, %v934
    %v937 = vunpack.c.l.s4 1983009808
    %v938 = vunpack.c.0.s8 %v937
    %v939 = vlaneseq
    %v940 = vshrl.u32 %v939, 7
    %v941 = vsub.s32 %v938, %v940
    %v942 = vrot.slane %v928, %v941
    %v943 = vcombine.low %v935, %v942
    %945 = vst [vmem:[#allocation2] sm:$0xff] %v943
    %v946 = vcombine.low %v485, %v486
    %v947 = vcombine.low %v487, %v488
    %v949 = vunpack.c.l.s4 1983009808
    %v950 = vunpack.c.0.s8 %v949
    %v951 = vlaneseq
    %v952 = vshrl.u32 %v951, 7
    %v953 = vsub.s32 %v950, %v952
    %v954 = vrot.slane %v946, %v953
    %v956 = vunpack.c.l.s4 1983009808
    %v957 = vunpack.c.0.s8 %v956
    %v958 = vlaneseq
    %v959 = vshrl.u32 %v958, 7
    %v960 = vsub.s32 %v957, %v959
    %v961 = vrot.slane %v947, %v960
    %v962 = vcombine.low %v954, %v961
    %964 = vst [vmem:[#allocation4] sm:$0xff] %v962
    // Predicated region
    $region38: #{tpu_custom_call.1} parent=1 // pred_check
      _
    $region39: #{tpu_custom_call.1} parent=1 // pred_check_branch
      %966 = sbr.rel (0) target = $region41
    $region40: #{tpu_custom_call.1} parent=1 // pred_region
      %s968 = ssub.s32 128, 128
      %969 = vsyncadd [#allocation3], %s968
      %s971 = sshll.u32 [#allocation2], 4
      %s972 = int_to_ptr.vmem [resolvable:$true] %s971
      %974 = dma.vmem_to_hbm [thread:$0]  %s972, 128, %s9, [#allocation3]
    $region41: #{tpu_custom_call.1} parent=1 // pred_fallthru
      _
    // Predicated region
    $region42: #{tpu_custom_call.1} parent=1 // pred_check
      _
    $region43: #{tpu_custom_call.1} parent=1 // pred_check_branch
      %976 = sbr.rel (0) target = $region45
    $region44: #{tpu_custom_call.1} parent=1 // pred_region
      %s978 = ssub.s32 128, 128
      %979 = vsyncadd [#allocation5], %s978
      %s981 = sshll.u32 [#allocation4], 4
      %s982 = int_to_ptr.vmem [resolvable:$true] %s981
      %984 = dma.vmem_to_hbm [thread:$0]  %s982, 128, %s10, [#allocation5]
    $region45: #{tpu_custom_call.1} parent=1 // pred_fallthru
      _
    // Predicated region
    $region46: #{tpu_custom_call.1} parent=1 // pred_check
      _
    $region47: #{tpu_custom_call.1} parent=1 // pred_check_branch
      %986 = sbr.rel (0) target = $region49
    $region48: #{tpu_custom_call.1} parent=1 // pred_region
      %987 = dma.done [#allocation3], 128
    $region49: #{tpu_custom_call.1} parent=1 // pred_fallthru
      _
    // Predicated region
    $region50: #{tpu_custom_call.1} parent=1 // pred_check
      _
    $region51: #{tpu_custom_call.1} parent=1 // pred_check_branch
      %989 = sbr.rel (0) target = $region53
    $region52: #{tpu_custom_call.1} parent=1 // pred_region
      %990 = dma.done [#allocation5], 128
    $region53: #{tpu_custom_call.1} parent=1 // pred_fallthru
      _
    %991 = vsyncpa [#allocation3], 1
    %992 = vsyncpa [#allocation5], 1

</llo_original>
